<compile_context>
chip_gen: v6e
topology: v6e:2x2x1
jax: 0.10.0
libtpu: 0.0.40
codegen_flags: <defaults>
</compile_context>

<pallas_src>
import functools
import math

import jax
import jax.numpy as jnp
from jax.experimental import pallas as pl
from jax.experimental.pallas import tpu as pltpu


# ----------------------------- Pallas kernels -------------------------------


def _user_update_kernel(u2_ref, u1_ref, tf_ref,
                        w_u2_ref, w_u1_ref, w_tf_ref, b_ref, o_ref):
    """Fused RNNCell update + L2-normalize for one batch tile.

    u2  : (TB, E)     user2 embeddings (streamed, input dtype)
    u1  : (TB, E)     user1 embeddings / hidden state (streamed)
    tf  : (TB, 1+NF)  [timediffs | features] (streamed, tiny)
    w_u2: (E, E)      W_ih[:, :E].T        (compute dtype, VMEM-resident)
    w_u1: (E, E)      W_hh.T
    w_tf: (1+NF, E)   W_ih[:, E:].T        (timediff + feature columns)
    b   : (1, E)      b_ih + b_hh          (f32)
    """
    cdt = w_u2_ref.dtype  # MXU compute dtype (bf16 by default); f32 accumulate.
    pre = jnp.dot(u2_ref[...].astype(cdt), w_u2_ref[...],
                  preferred_element_type=jnp.float32)
    pre = pre + jnp.dot(u1_ref[...].astype(cdt), w_u1_ref[...],
                        preferred_element_type=jnp.float32)
    pre = pre + jnp.dot(tf_ref[...].astype(cdt), w_tf_ref[...],
                        preferred_element_type=jnp.float32)
    pre = pre + b_ref[...]                              # f32 bias
    h = jnp.tanh(pre)                                   # f32 epilogue (EUP)
    # F.normalize(x, p=2, dim=1, eps=1e-12) == x / max(||x||_2, 1e-12)
    sumsq = jnp.sum(h * h, axis=1, keepdims=True)
    inv = jax.lax.rsqrt(jnp.maximum(sumsq, 1e-24))      # (1e-12)^2 guard
    o_ref[...] = (h * inv).astype(o_ref.dtype)


def _project_kernel(u1_ref, td_ref, we_ref, be1_ref, o_ref):
    """context_convert: u1 * (1 + Linear(1, E)(td)); be1 = 1 + bias prefolded."""
    scale = td_ref[...] * we_ref[...] + be1_ref[...]    # (TB,1)*(1,E) broadcast
    o_ref[...] = (u1_ref[...] * scale).astype(o_ref.dtype)


# ------------------------------ helpers --------------------------------------


def _round_up(x, m):
    return (x + m - 1) // m * m


def _batch_tiling(batch, batch_tile, target_steps=8):
    """8-aligned batch tile aiming for >= target_steps grid steps (megacore)."""
    tb = _round_up(max(pl.cdiv(batch, target_steps), 1), 8)
    tb = min(tb, batch_tile)
    tb = min(tb, _round_up(batch, 8))   # never larger than one (padded) batch
    return max(tb, 8)


def _tile_vmem_bytes(rows, cols, dtype):
    """VMEM footprint of one buffer: lane-padded to 128, sublane-padded to 8."""
    return _round_up(rows, 8) * _round_up(cols, 128) * jnp.dtype(dtype).itemsize


def _vmem_limit(stream_tile_bytes, resident_bytes):
    need = 2 * stream_tile_bytes + resident_bytes       # double-buffered streams
    need = int(1.5 * need) + (4 << 20)                  # headroom
    return max(16 << 20, min(need, 64 << 20))           # 64 MiB cap (v7x physical)


# --------------------------- parameter preparation ---------------------------


def prepare_jodie_params(raw, embedding_dim, compute_dtype=jnp.bfloat16):
    """One-time weight prep: transpose, split per input stream, fold biases.

    compute_dtype=jnp.bfloat16 (default) gives native-bf16 MXU dots with f32
    accumulation; use jnp.float32 for exact f32 parity with PyTorch.
    """
    E = embedding_dim
    w_ih = raw["rnn_w_ih"]              # (E, E + 1 + NF), PyTorch layout
    w_hh = raw["rnn_w_hh"]              # (E, E)
    return {
        "w_u2": w_ih[:, :E].T.astype(compute_dtype),          # (E, E)
        "w_tf": w_ih[:, E:].T.astype(compute_dtype),           # (1+NF, E)
        "w_u1": w_hh.T.astype(compute_dtype),                  # (E, E)
        "b": (raw["rnn_b_ih"] + raw["rnn_b_hh"]).reshape(1, E).astype(jnp.float32),
        "we": raw["emb_w"].T.astype(jnp.float32),              # (1, E)
        "be1": (1.0 + raw["emb_b"]).reshape(1, E).astype(jnp.float32),
    }


# ------------------------------ JAX wrappers ---------------------------------


def jodie_forward_user_update(prep, user1_emb, user2_emb, timediffs, features,
                              *, batch_tile=2048):
    """select == 'user_update' branch."""
    B, E = user1_emb.shape
    NF = features.shape[1]
    ktf = 1 + NF
    tb = _batch_tiling(B, batch_tile)
    grid = (pl.cdiv(B, tb),)
    out_dtype = user1_emb.dtype

    # Only the tiny (B,1) and (B,NF) arrays are concatenated (negligible HBM
    # traffic); the full-E embedding streams go into the kernel untouched.
    tf = jnp.concatenate([timediffs, features], axis=1)        # (B, 1+NF)

    act_isz = jnp.dtype(user1_emb.dtype).itemsize
    w_isz = jnp.dtype(prep["w_u2"].dtype).itemsize
    weights_bytes = (2 * E * E + ktf * E) * w_isz + E * 4
    cost = pl.CostEstimate(
        flops=2 * B * E * (2 * E + ktf) + 6 * B * E,
        transcendentals=B * E + B,                              # tanh + rsqrt
        bytes_accessed=(2 * B * E + B * ktf) * act_isz + weights_bytes
        + B * E * jnp.dtype(out_dtype).itemsize)

    stream_bytes = (2 * _tile_vmem_bytes(tb, E, user1_emb.dtype)
                    + _tile_vmem_bytes(tb, ktf, tf.dtype)
                    + _tile_vmem_bytes(tb, E, out_dtype))
    resident_bytes = (2 * _tile_vmem_bytes(E, E, prep["w_u2"].dtype)
                      + _tile_vmem_bytes(ktf, E, prep["w_tf"].dtype)
                      + _tile_vmem_bytes(1, E, jnp.float32))

    return pl.pallas_call(
        _user_update_kernel,
        out_shape=jax.ShapeDtypeStruct((B, E), out_dtype),
        grid=grid,
        in_specs=[
            pl.BlockSpec((tb, E), lambda i: (i, 0)),     # user2 tile (streamed)
            pl.BlockSpec((tb, E), lambda i: (i, 0)),     # user1 tile (streamed)
            pl.BlockSpec((tb, ktf), lambda i: (i, 0)),   # [td | features] tile
            pl.BlockSpec((E, E), lambda i: (0, 0)),      # weights: VMEM-resident
            pl.BlockSpec((E, E), lambda i: (0, 0)),
            pl.BlockSpec((ktf, E), lambda i: (0, 0)),
            pl.BlockSpec((1, E), lambda i: (0, 0)),
        ],
        out_specs=pl.BlockSpec((tb, E), lambda i: (i, 0)),
        compiler_params=pltpu.CompilerParams(
            dimension_semantics=("parallel",),
            vmem_limit_bytes=_vmem_limit(stream_bytes, resident_bytes)),
        cost_estimate=cost,
    )(user2_emb, user1_emb, tf, prep["w_u2"], prep["w_u1"], prep["w_tf"],
      prep["b"])


def jodie_forward_project(prep, user1_emb, timediffs, *, batch_tile=2048):
    """select == 'project' branch (context_convert); pure streaming VPU kernel."""
    B, E = user1_emb.shape
    tb = _batch_tiling(B, batch_tile)
    grid = (pl.cdiv(B, tb),)
    out_dtype = user1_emb.dtype

    act_isz = jnp.dtype(user1_emb.dtype).itemsize
    cost = pl.CostEstimate(
        flops=3 * B * E,
        transcendentals=0,
        bytes_accessed=B * E * act_isz + B * 4 + 2 * E * 4
        + B * E * jnp.dtype(out_dtype).itemsize)

    stream_bytes = (_tile_vmem_bytes(tb, E, user1_emb.dtype)
                    + _tile_vmem_bytes(tb, 1, timediffs.dtype)
                    + _tile_vmem_bytes(tb, E, out_dtype))
    resident_bytes = 2 * _tile_vmem_bytes(1, E, jnp.float32)

    return pl.pallas_call(
        _project_kernel,
        out_shape=jax.ShapeDtypeStruct((B, E), out_dtype),
        grid=grid,
        in_specs=[
            pl.BlockSpec((tb, E), lambda i: (i, 0)),
            pl.BlockSpec((tb, 1), lambda i: (i, 0)),
            pl.BlockSpec((1, E), lambda i: (0, 0)),
            pl.BlockSpec((1, E), lambda i: (0, 0)),
        ],
        out_specs=pl.BlockSpec((tb, E), lambda i: (i, 0)),
        compiler_params=pltpu.CompilerParams(
            dimension_semantics=("parallel",),
            vmem_limit_bytes=_vmem_limit(stream_bytes, resident_bytes)),
        cost_estimate=cost,
    )(user1_emb, timediffs, prep["we"], prep["be1"])


# --------------------------- parameter construction --------------------------


def init_jodie_params(key, embedding_dim, num_features):
    """Deterministic synthetic parameters matching JODIE.__init__ shapes."""
    E = embedding_dim
    rnn_in = E + 1 + num_features
    ks = jax.random.split(key, 6)

    stdv_rnn = 1.0 / math.sqrt(E)
    stdv_emb = 1.0 / math.sqrt(1)   # NormalLinear(1, E): stdv = 1/sqrt(in_features)

    return {
        # nn.RNNCell(rnn_in, E)
        "rnn_w_ih": jax.random.uniform(ks[0], (E, rnn_in), jnp.float32,
                                       -stdv_rnn, stdv_rnn),
        "rnn_w_hh": jax.random.uniform(ks[1], (E, E), jnp.float32,
                                       -stdv_rnn, stdv_rnn),
        "rnn_b_ih": jax.random.uniform(ks[2], (E,), jnp.float32,
                                       -stdv_rnn, stdv_rnn),
        "rnn_b_hh": jax.random.uniform(ks[3], (E,), jnp.float32,
                                       -stdv_rnn, stdv_rnn),
        # NormalLinear(1, E): weight/bias ~ N(0, stdv)
        "emb_w": stdv_emb * jax.random.normal(ks[4], (E, 1), jnp.float32),
        "emb_b": stdv_emb * jax.random.normal(ks[5], (E,), jnp.float32),
        # TODO(synk): linear_layer1/2, prediction_layer and initial_user_embedding
        # are defined in __init__ but unused by forward(); omitted here.
    }


# ----------------------------------- main ------------------------------------


if __name__ == "__main__":
    B = 16           # batch of interactions (small demo; kernel scales to 10k+)
    E = 128          # args.embedding_dim (JODIE default -> lane-dense output)
    NF = 4           # num_features

    key = jax.random.PRNGKey(0)
    kp, k1, k2, k3, k4 = jax.random.split(key, 5)

    raw_params = init_jodie_params(kp, E, NF)
    prep_bf16 = prepare_jodie_params(raw_params, E)                   # default bf16 MXU path
    prep_f32 = prepare_jodie_params(raw_params, E, jnp.float32)       # exact f32 path

    user1_emb = jax.random.normal(k1, (B, E), jnp.float32)
    user2_emb = jax.random.normal(k2, (B, E), jnp.float32)
    timediffs = jax.random.uniform(k3, (B, 1), jnp.float32)
    features = jax.random.normal(k4, (B, NF), jnp.float32)

    # select == 'user_update'
    upd_bf16 = jax.block_until_ready(jax.jit(functools.partial(
        jodie_forward_user_update, prep_bf16))(user1_emb, user2_emb,
                                               timediffs, features))
    upd_f32 = jax.block_until_ready(jax.jit(functools.partial(
        jodie_forward_user_update, prep_f32))(user1_emb, user2_emb,
                                              timediffs, features))

    # select == 'project'
    proj = jax.block_until_ready(jax.jit(functools.partial(
        jodie_forward_project, prep_f32))(user1_emb, timediffs))

    # Pure-JAX reference (same math, outside Pallas, full f32).
    w_ih, w_hh = raw_params["rnn_w_ih"], raw_params["rnn_w_hh"]
    b = raw_params["rnn_b_ih"] + raw_params["rnn_b_hh"]
    inp2 = jnp.concatenate([user2_emb, timediffs, features], axis=1)
    h_ref = jnp.tanh(inp2 @ w_ih.T + user1_emb @ w_hh.T + b)
    upd_ref = h_ref / jnp.maximum(
        jnp.linalg.norm(h_ref, axis=1, keepdims=True), 1e-12)
    proj_ref = user1_emb * (1.0 + timediffs @ raw_params["emb_w"].T
                            + raw_params["emb_b"])

    assert upd_bf16.shape == (B, E) and upd_f32.shape == (B, E)
    assert proj.shape == (B, E)
    # f32 compute path: tight tolerance (exact math, only summation-order diffs).
    assert jnp.allclose(upd_f32, upd_ref, atol=1e-5, rtol=1e-5)
    # bf16 matmul operands (f32 accumulate + f32 epilogue): ~1e-2 relative.
    assert jnp.allclose(upd_bf16, upd_ref, atol=2e-2, rtol=2e-2)
    assert jnp.allclose(proj, proj_ref, atol=1e-5, rtol=1e-5)

    print("KERNEL_OK")
</pallas_src>

<mosaic_0001>
module attributes {stable_mosaic.version = 11 : i64} {
  func.func @_user_update_kernel(%arg0: i32, %arg1: memref<8x128xf32, #tpu.memory_space<vmem>>, %arg2: memref<8x128xf32, #tpu.memory_space<vmem>>, %arg3: memref<8x5xf32, #tpu.memory_space<vmem>>, %arg4: memref<128x128xbf16, #tpu.memory_space<vmem>>, %arg5: memref<128x128xbf16, #tpu.memory_space<vmem>>, %arg6: memref<5x128xbf16, #tpu.memory_space<vmem>>, %arg7: memref<1x128xf32, #tpu.memory_space<vmem>>, %arg8: memref<8x128xf32, #tpu.memory_space<vmem>>) attributes {dimension_semantics = [#tpu.dimension_semantics<parallel>], iteration_bounds = array<i64: 2>, scalar_prefetch = 0 : i64, scratch_operands = 0 : i64, tpu.core_type = #tpu.core_type<tc>, window_params = [{transform_indices = @transform_0, window_bounds = array<i64: 8, 128>}, {transform_indices = @transform_1, window_bounds = array<i64: 8, 128>}, {transform_indices = @transform_2, window_bounds = array<i64: 8, 5>}, {pipeline_mode = #tpu.pipeline_mode<synchronous>, transform_indices = @transform_3, window_bounds = array<i64: 128, 128>}, {pipeline_mode = #tpu.pipeline_mode<synchronous>, transform_indices = @transform_4, window_bounds = array<i64: 128, 128>}, {pipeline_mode = #tpu.pipeline_mode<synchronous>, transform_indices = @transform_5, window_bounds = array<i64: 5, 128>}, {pipeline_mode = #tpu.pipeline_mode<synchronous>, transform_indices = @transform_6, window_bounds = array<i64: 1, 128>}, {transform_indices = @transform_7, window_bounds = array<i64: 8, 128>}]} {
    %c0 = arith.constant 0 : index
    %c0_0 = arith.constant 0 : index
    %0 = vector.load %arg1[%c0, %c0_0] : memref<8x128xf32, #tpu.memory_space<vmem>>, vector<8x128xf32>
    %1 = arith.truncf %0 : vector<8x128xf32> to vector<8x128xbf16>
    %c0_1 = arith.constant 0 : index
    %c0_2 = arith.constant 0 : index
    %2 = vector.load %arg4[%c0_1, %c0_2] : memref<128x128xbf16, #tpu.memory_space<vmem>>, vector<128x128xbf16>
    %cst = arith.constant dense<0.000000e+00> : vector<8x128xf32>
    %3 = tpu.matmul %1, %2, %cst {dimension_numbers = #tpu.dot_dimension_numbers<[1], [0], [0], [1], [0, 0, 1, 1], [], []>} : vector<8x128xbf16>, vector<128x128xbf16>, vector<8x128xf32> -> vector<8x128xf32>
    %c0_3 = arith.constant 0 : index
    %c0_4 = arith.constant 0 : index
    %4 = vector.load %arg2[%c0_3, %c0_4] : memref<8x128xf32, #tpu.memory_space<vmem>>, vector<8x128xf32>
    %5 = arith.truncf %4 : vector<8x128xf32> to vector<8x128xbf16>
    %c0_5 = arith.constant 0 : index
    %c0_6 = arith.constant 0 : index
    %6 = vector.load %arg5[%c0_5, %c0_6] : memref<128x128xbf16, #tpu.memory_space<vmem>>, vector<128x128xbf16>
    %cst_7 = arith.constant dense<0.000000e+00> : vector<8x128xf32>
    %7 = tpu.matmul %5, %6, %cst_7 {dimension_numbers = #tpu.dot_dimension_numbers<[1], [0], [0], [1], [0, 0, 1, 1], [], []>} : vector<8x128xbf16>, vector<128x128xbf16>, vector<8x128xf32> -> vector<8x128xf32>
    %8 = arith.addf %3, %7 : vector<8x128xf32>
    %c0_8 = arith.constant 0 : index
    %c0_9 = arith.constant 0 : index
    %9 = vector.load %arg3[%c0_8, %c0_9] : memref<8x5xf32, #tpu.memory_space<vmem>>, vector<8x5xf32>
    %10 = arith.truncf %9 : vector<8x5xf32> to vector<8x5xbf16>
    %c0_10 = arith.constant 0 : index
    %c0_11 = arith.constant 0 : index
    %11 = vector.load %arg6[%c0_10, %c0_11] : memref<5x128xbf16, #tpu.memory_space<vmem>>, vector<5x128xbf16>
    %cst_12 = arith.constant dense<0.000000e+00> : vector<8x128xf32>
    %12 = tpu.matmul %10, %11, %cst_12 {dimension_numbers = #tpu.dot_dimension_numbers<[1], [0], [0], [1], [0, 0, 1, 1], [], []>} : vector<8x5xbf16>, vector<5x128xbf16>, vector<8x128xf32> -> vector<8x128xf32>
    %13 = arith.addf %8, %12 : vector<8x128xf32>
    %c0_13 = arith.constant 0 : index
    %c0_14 = arith.constant 0 : index
    %14 = vector.load %arg7[%c0_13, %c0_14] : memref<1x128xf32, #tpu.memory_space<vmem>>, vector<1x128xf32>
    %15 = vector.broadcast %14 : vector<1x128xf32> to vector<8x128xf32>
    %16 = arith.addf %13, %15 : vector<8x128xf32>
    %17 = math.tanh %16 : vector<8x128xf32>
    %18 = arith.mulf %17, %17 : vector<8x128xf32>
    %cst_15 = arith.constant dense<0.000000e+00> : vector<8xf32>
    %19 = vector.multi_reduction <add>, %18, %cst_15 [1] : vector<8x128xf32> to vector<8xf32>
    %20 = vector.shape_cast %19 : vector<8xf32> to vector<8x1xf32>
    %cst_16 = arith.constant 1.000000e-24 : f32
    %21 = vector.broadcast %cst_16 : f32 to vector<8x1xf32>
    %22 = arith.maximumf %20, %21 : vector<8x1xf32>
    %23 = math.rsqrt %22 : vector<8x1xf32>
    %24 = vector.broadcast %23 : vector<8x1xf32> to vector<8x128xf32>
    %25 = arith.mulf %17, %24 : vector<8x128xf32>
    %c0_17 = arith.constant 0 : index
    %c0_18 = arith.constant 0 : index
    %26 = vector.load %arg8[%c0_17, %c0_18] : memref<8x128xf32, #tpu.memory_space<vmem>>, vector<8x128xf32>
    tpu.vector_store %arg8[%c0_17, %c0_18], %25 {strides = array<i32>} : memref<8x128xf32, #tpu.memory_space<vmem>>, vector<8x128xf32>,
    return
  }
  func.func @transform_0(%arg0: i32) -> (i32, i32) {
    %c0_i32 = arith.constant 0 : i32
    %c0_i32_0 = arith.constant 0 : i32
    return %arg0, %c0_i32 : i32, i32
  }
  func.func @transform_1(%arg0: i32) -> (i32, i32) {
    %c0_i32 = arith.constant 0 : i32
    %c0_i32_0 = arith.constant 0 : i32
    return %arg0, %c0_i32 : i32, i32
  }
  func.func @transform_2(%arg0: i32) -> (i32, i32) {
    %c0_i32 = arith.constant 0 : i32
    %c0_i32_0 = arith.constant 0 : i32
    return %arg0, %c0_i32 : i32, i32
  }
  func.func @transform_3(%arg0: i32) -> (i32, i32) {
    %c0_i32 = arith.constant 0 : i32
    %c0_i32_0 = arith.constant 0 : i32
    %c0_i32_1 = arith.constant 0 : i32
    return %c0_i32, %c0_i32_0 : i32, i32
  }
  func.func @transform_4(%arg0: i32) -> (i32, i32) {
    %c0_i32 = arith.constant 0 : i32
    %c0_i32_0 = arith.constant 0 : i32
    %c0_i32_1 = arith.constant 0 : i32
    return %c0_i32, %c0_i32_0 : i32, i32
  }
  func.func @transform_5(%arg0: i32) -> (i32, i32) {
    %c0_i32 = arith.constant 0 : i32
    %c0_i32_0 = arith.constant 0 : i32
    %c0_i32_1 = arith.constant 0 : i32
    return %c0_i32, %c0_i32_0 : i32, i32
  }
  func.func @transform_6(%arg0: i32) -> (i32, i32) {
    %c0_i32 = arith.constant 0 : i32
    %c0_i32_0 = arith.constant 0 : i32
    %c0_i32_1 = arith.constant 0 : i32
    return %c0_i32, %c0_i32_0 : i32, i32
  }
  func.func @transform_7(%arg0: i32) -> (i32, i32) {
    %c0_i32 = arith.constant 0 : i32
    %c0_i32_0 = arith.constant 0 : i32
    return %arg0, %c0_i32 : i32, i32
  }
}

</mosaic_0001>

<llo_original>
// kernel: jodie_forward_user_update.1
$region0: #{jodie_forward_user_update.1}
  #allocation0 [shape = 'u32[]', space=smem, size = 0x4, offset = 0x4, fixed_abs, tag = 'smem constant byte address 0x4 - core index']
  #allocation1 [shape = 'u32[144,128]{1,0:T(1,128)}', space=vmem, size = 0x12000, scoped, tag = 'internal scratch']
  %s0 = inlined_call_operand.vmem [shape: f32[16,128], index: 0, kind: input, shape index: {}]
  %s1 = inlined_call_operand.hbm [shape: f32[16,128], index: 1, kind: input, shape index: {}]
  %s2 = inlined_call_operand.vmem [shape: f32[16,5], index: 2, kind: input, shape index: {}]
  %s3 = inlined_call_operand.hbm [shape: bf16[128,128], index: 3, kind: input, shape index: {}]
  %s4 = inlined_call_operand.vmem [shape: bf16[128,128], index: 4, kind: input, shape index: {}]
  %s5 = inlined_call_operand.vmem [shape: bf16[5,128], index: 5, kind: input, shape index: {}]
  %s6 = inlined_call_operand.vmem [shape: f32[1,128], index: 6, kind: input, shape index: {}]
  %s7 = inlined_call_operand.hbm [shape: f32[16,128], index: 7, kind: output, shape index: {}]
  %s8 = sld [smem:[#allocation0]]
  $region69: #{jodie_forward_user_update.1} parent=0
    _
  %s10 = ssub.s32 1, %s8
  %s11 = scalar_select 0, %s10, %s8
  $region1: #{jodie_forward_user_update.1} parent=0
    #allocation2 [shape = 'u8[8192]{0}', space=vmem, size = 0x2000, scoped, tag = 'input window, operand 1']
    #allocation3 [shape = 's32[2]{0}', space=sflag, size = 0x8, scoped, tag = 'scoped memory for jodie_forward_user_update.1']
    #allocation4 [shape = 's32[2]{0}', space=sflag, size = 0x8, scoped, tag = 'scoped memory for jodie_forward_user_update.1']
    #allocation5 [shape = 'u8[32768]{0}', space=vmem, size = 0x8000, scoped, tag = 'input window, operand 3, single buffered']
    #allocation6 [shape = 's32[1]{0}', space=sflag, size = 0x4, scoped, tag = 'scoped memory for jodie_forward_user_update.1']
    #allocation7 [shape = 'u8[8192]{0}', space=vmem, size = 0x2000, scoped, tag = 'output window, operand 0']
    %12 = vsyncpa [#allocation3], 0
    %s13 = scalar_lea.sflag [#allocation3], 1
    %14 = vsyncpa %s13, 0
    %15 = vsyncpa [#allocation6], 0
    %16 = vsyncpa [#allocation4], 0
    %s17 = scalar_lea.sflag [#allocation4], 1
    %18 = vsyncpa %s17, 0
    loop: start=0, step=1, limit=4
    $region2: #{jodie_forward_user_update.1} parent=1 // loop_pre_header
      _
    $region3: #{jodie_forward_user_update.1} parent=1 // loop_header
      %s20 = sphi 0, %s24
      %p21 = scmp.ge.s32.totalorder %s20, 4
      %s30 = sphi 0, %s32
      %s33 = sphi 0, %s30
      %s34 = sphi 0, %s33
      %s50 = sphi 0, %s34
      %s56 = sphi 0, %s58
      %s59 = sphi 0, %s56
      %s60 = sphi 0, %s59
      %s76 = sphi 0, %s60
      %s82 = sphi 0, %s84
      %s85 = sphi 0, %s82
      %s86 = sphi 0, %s85
      %s102 = sphi 0, %s86
      %s106 = sphi 0, %s106
      %s108 = sphi 0, %s106
      %s109 = sphi 0, %s108
      %s123 = sphi 0, %s109
      %s127 = sphi 0, %s127
      %s129 = sphi 0, %s127
      %s130 = sphi 0, %s129
      %s144 = sphi 0, %s130
      %s148 = sphi 0, %s148
      %s150 = sphi 0, %s148
      %s151 = sphi 0, %s150
      %s165 = sphi 0, %s151
      %s169 = sphi 0, %s169
      %s171 = sphi 0, %s169
      %s172 = sphi 0, %s171
      %s186 = sphi 0, %s172
      %s192 = sphi 0, %s194
      %s195 = sphi 0, %s192
      %s196 = sphi 0, %s195
      %s212 = sphi 0, %s196
    $region4: #{jodie_forward_user_update.1} parent=1 // loop_header_branch
      %23 = sbr.rel (%p21) target = $region8
    $region5: #{jodie_forward_user_update.1} parent=1 // loop_body
      %s25 = ssub.s32 %s20, 1
      %s26 = ssub.s32 %s20, 2
      %s27 = sadd.s32 %s20, 1
      %s28 = ssub.s32 %s20, %s27
      %p29 = scmp.eq.s32.totalorder %s28, 0
      %s31 = sadd.s32 %s30, 1
      %s32 = scalar_select %p29, %s30, %s31
      %p35 = pneg %p29
      %p36 = scmp.eq.s32.totalorder %s20, 1
      %p37 = por %p35, %p36
      %p38 = scmp.ne.s32.totalorder %s30, %s33
      %p39 = scmp.eq.s32.totalorder %s20, 0
      %p40 = por %p38, %p39
      %p41 = scmp.ne.s32.totalorder %s30, %s33
      %p42 = scmp.eq.s32.totalorder %s25, 1
      %p43 = por %p41, %p42
      %p44 = scmp.ne.s32.totalorder %s33, %s34
      %p45 = scmp.eq.s32.totalorder %s25, 0
      %p46 = por %p44, %p45
      %p47 = scmp.ne.s32.totalorder %s33, %s34
      %p48 = scmp.eq.s32.totalorder %s26, 1
      %p49 = por %p47, %p48
      %p51 = scmp.ne.s32.totalorder %s34, %s50
      %p52 = scmp.eq.s32.totalorder %s26, 0
      %p53 = por %p51, %p52
      %s54 = ssub.s32 %s20, %s27
      %p55 = scmp.eq.s32.totalorder %s54, 0
      %s57 = sadd.s32 %s56, 1
      %s58 = scalar_select %p55, %s56, %s57
      %p61 = pneg %p55
      %p62 = scmp.eq.s32.totalorder %s20, 1
      %p63 = por %p61, %p62
      %p64 = scmp.ne.s32.totalorder %s56, %s59
      %p65 = scmp.eq.s32.totalorder %s20, 0
      %p66 = por %p64, %p65
      %p67 = scmp.ne.s32.totalorder %s56, %s59
      %p68 = scmp.eq.s32.totalorder %s25, 1
      %p69 = por %p67, %p68
      %p70 = scmp.ne.s32.totalorder %s59, %s60
      %p71 = scmp.eq.s32.totalorder %s25, 0
      %p72 = por %p70, %p71
      %p73 = scmp.ne.s32.totalorder %s59, %s60
      %p74 = scmp.eq.s32.totalorder %s26, 1
      %p75 = por %p73, %p74
      %p77 = scmp.ne.s32.totalorder %s60, %s76
      %p78 = scmp.eq.s32.totalorder %s26, 0
      %p79 = por %p77, %p78
      %s80 = ssub.s32 %s20, %s27
      %p81 = scmp.eq.s32.totalorder %s80, 0
      %s83 = sadd.s32 %s82, 1
      %s84 = scalar_select %p81, %s82, %s83
      %p87 = pneg %p81
      %p88 = scmp.eq.s32.totalorder %s20, 1
      %p89 = por %p87, %p88
      %p90 = scmp.ne.s32.totalorder %s82, %s85
      %p91 = scmp.eq.s32.totalorder %s20, 0
      %p92 = por %p90, %p91
      %p93 = scmp.ne.s32.totalorder %s82, %s85
      %p94 = scmp.eq.s32.totalorder %s25, 1
      %p95 = por %p93, %p94
      %p96 = scmp.ne.s32.totalorder %s85, %s86
      %p97 = scmp.eq.s32.totalorder %s25, 0
      %p98 = por %p96, %p97
      %p99 = scmp.ne.s32.totalorder %s85, %s86
      %p100 = scmp.eq.s32.totalorder %s26, 1
      %p101 = por %p99, %p100
      %p103 = scmp.ne.s32.totalorder %s86, %s102
      %p104 = scmp.eq.s32.totalorder %s26, 0
      %p105 = por %p103, %p104
      %s107 = sadd.s32 %s106, 1
      %p110 = scmp.eq.s32.totalorder %s20, 1
      %p111 = scmp.ne.s32.totalorder %s106, %s108
      %p112 = scmp.eq.s32.totalorder %s20, 0
      %p113 = por %p111, %p112
      %p114 = scmp.ne.s32.totalorder %s106, %s108
      %p115 = scmp.eq.s32.totalorder %s25, 1
      %p116 = por %p114, %p115
      %p117 = scmp.ne.s32.totalorder %s108, %s109
      %p118 = scmp.eq.s32.totalorder %s25, 0
      %p119 = por %p117, %p118
      %p120 = scmp.ne.s32.totalorder %s108, %s109
      %p121 = scmp.eq.s32.totalorder %s26, 1
      %p122 = por %p120, %p121
      %p124 = scmp.ne.s32.totalorder %s109, %s123
      %p125 = scmp.eq.s32.totalorder %s26, 0
      %p126 = por %p124, %p125
      %s128 = sadd.s32 %s127, 1
      %p131 = scmp.eq.s32.totalorder %s20, 1
      %p132 = scmp.ne.s32.totalorder %s127, %s129
      %p133 = scmp.eq.s32.totalorder %s20, 0
      %p134 = por %p132, %p133
      %p135 = scmp.ne.s32.totalorder %s127, %s129
      %p136 = scmp.eq.s32.totalorder %s25, 1
      %p137 = por %p135, %p136
      %p138 = scmp.ne.s32.totalorder %s129, %s130
      %p139 = scmp.eq.s32.totalorder %s25, 0
      %p140 = por %p138, %p139
      %p141 = scmp.ne.s32.totalorder %s129, %s130
      %p142 = scmp.eq.s32.totalorder %s26, 1
      %p143 = por %p141, %p142
      %p145 = scmp.ne.s32.totalorder %s130, %s144
      %p146 = scmp.eq.s32.totalorder %s26, 0
      %p147 = por %p145, %p146
      %s149 = sadd.s32 %s148, 1
      %p152 = scmp.eq.s32.totalorder %s20, 1
      %p153 = scmp.ne.s32.totalorder %s148, %s150
      %p154 = scmp.eq.s32.totalorder %s20, 0
      %p155 = por %p153, %p154
      %p156 = scmp.ne.s32.totalorder %s148, %s150
      %p157 = scmp.eq.s32.totalorder %s25, 1
      %p158 = por %p156, %p157
      %p159 = scmp.ne.s32.totalorder %s150, %s151
      %p160 = scmp.eq.s32.totalorder %s25, 0
      %p161 = por %p159, %p160
      %p162 = scmp.ne.s32.totalorder %s150, %s151
      %p163 = scmp.eq.s32.totalorder %s26, 1
      %p164 = por %p162, %p163
      %p166 = scmp.ne.s32.totalorder %s151, %s165
      %p167 = scmp.eq.s32.totalorder %s26, 0
      %p168 = por %p166, %p167
      %s170 = sadd.s32 %s169, 1
      %p173 = scmp.eq.s32.totalorder %s20, 1
      %p174 = scmp.ne.s32.totalorder %s169, %s171
      %p175 = scmp.eq.s32.totalorder %s20, 0
      %p176 = por %p174, %p175
      %p177 = scmp.ne.s32.totalorder %s169, %s171
      %p178 = scmp.eq.s32.totalorder %s25, 1
      %p179 = por %p177, %p178
      %p180 = scmp.ne.s32.totalorder %s171, %s172
      %p181 = scmp.eq.s32.totalorder %s25, 0
      %p182 = por %p180, %p181
      %p183 = scmp.ne.s32.totalorder %s171, %s172
      %p184 = scmp.eq.s32.totalorder %s26, 1
      %p185 = por %p183, %p184
      %p187 = scmp.ne.s32.totalorder %s172, %s186
      %p188 = scmp.eq.s32.totalorder %s26, 0
      %p189 = por %p187, %p188
      %s190 = ssub.s32 %s20, %s27
      %p191 = scmp.eq.s32.totalorder %s190, 0
      %s193 = sadd.s32 %s192, 1
      %s194 = scalar_select %p191, %s192, %s193
      %p197 = pneg %p191
      %p198 = scmp.eq.s32.totalorder %s20, 1
      %p199 = por %p197, %p198
      %p200 = scmp.ne.s32.totalorder %s192, %s195
      %p201 = scmp.eq.s32.totalorder %s20, 0
      %p202 = por %p200, %p201
      %p203 = scmp.ne.s32.totalorder %s192, %s195
      %p204 = scmp.eq.s32.totalorder %s25, 1
      %p205 = por %p203, %p204
      %p206 = scmp.ne.s32.totalorder %s195, %s196
      %p207 = scmp.eq.s32.totalorder %s25, 0
      %p208 = por %p206, %p207
      %p209 = scmp.ne.s32.totalorder %s195, %s196
      %p210 = scmp.eq.s32.totalorder %s26, 1
      %p211 = por %p209, %p210
      %p213 = scmp.ne.s32.totalorder %s196, %s212
      %p214 = scmp.eq.s32.totalorder %s26, 0
      %p215 = por %p213, %p214
      %p216 = scmp.le.s32.totalorder 1, %s20
      %p217 = scmp.lt.s32.totalorder %s20, 3
      %p218 = pnand %p216, %p217
      %p219 = pneg %p218
      // Predicated region
      $region9: #{jodie_forward_user_update.1} parent=5 // pred_check
        _
      $region10: #{jodie_forward_user_update.1} parent=5 // pred_check_branch
        %221 = sbr.rel (%p218) target = $region12
      $region11: #{jodie_forward_user_update.1} parent=5 // pred_region
        %s222 = ssub.s32 %s20, 1
        // Predicated region
        $region13: #{jodie_forward_user_update.1} parent=11 // pred_check
          %p223 = pneg %p119
        $region14: #{jodie_forward_user_update.1} parent=11 // pred_check_branch
          %225 = sbr.rel (%p223) target = $region16
        $region15: #{jodie_forward_user_update.1} parent=11 // pred_region
          %s227 = ssub.s32 1024, 1024
          %228 = vsyncadd [#allocation6], %s227
          %s229 = sshll.u32 [#allocation5], 4
          %s230 = int_to_ptr.vmem [resolvable:$true] %s229
          %235 = dma.hbm_to_vmem [thread:$0]  %s3, 1024, %s230, [#allocation6], 64, 64, 4
        $region16: #{jodie_forward_user_update.1} parent=11 // pred_fallthru
          _
        // Predicated region
        $region17: #{jodie_forward_user_update.1} parent=11 // pred_check
          %p236 = pneg %p140
        $region18: #{jodie_forward_user_update.1} parent=11 // pred_check_branch
          %238 = sbr.rel (%p236) target = $region20
        $region19: #{jodie_forward_user_update.1} parent=11 // pred_region
          _
        $region20: #{jodie_forward_user_update.1} parent=11 // pred_fallthru
          _
        // Predicated region
        $region21: #{jodie_forward_user_update.1} parent=11 // pred_check
          %p239 = pneg %p161
        $region22: #{jodie_forward_user_update.1} parent=11 // pred_check_branch
          %241 = sbr.rel (%p239) target = $region24
        $region23: #{jodie_forward_user_update.1} parent=11 // pred_region
          _
        $region24: #{jodie_forward_user_update.1} parent=11 // pred_fallthru
          _
        // Predicated region
        $region25: #{jodie_forward_user_update.1} parent=11 // pred_check
          %p242 = pneg %p182
        $region26: #{jodie_forward_user_update.1} parent=11 // pred_check_branch
          %244 = sbr.rel (%p242) target = $region28
        $region27: #{jodie_forward_user_update.1} parent=11 // pred_region
          _
        $region28: #{jodie_forward_user_update.1} parent=11 // pred_fallthru
          _
      $region12: #{jodie_forward_user_update.1} parent=5 // pred_fallthru
        _
      %p245 = scmp.lt.s32.totalorder %s20, 2
      // Predicated region
      $region29: #{jodie_forward_user_update.1} parent=5 // pred_check
        %p246 = pneg %p245
      $region30: #{jodie_forward_user_update.1} parent=5 // pred_check_branch
        %248 = sbr.rel (%p246) target = $region32
      $region31: #{jodie_forward_user_update.1} parent=5 // pred_region
        // Predicated region
        $region33: #{jodie_forward_user_update.1} parent=31 // pred_check
          %p249 = pneg %p40
        $region34: #{jodie_forward_user_update.1} parent=31 // pred_check_branch
          %251 = sbr.rel (%p249) target = $region36
        $region35: #{jodie_forward_user_update.1} parent=31 // pred_region
          %p252 = scmp.lt.s32.totalorder %s20, 1
          %s253 = scalar_select %p252, %s20, 1
          %s254 = smul.addr %s253, 8
          %s255 = scalar_lea.vmem %s0, %s254
        $region36: #{jodie_forward_user_update.1} parent=31 // pred_fallthru
          _
        // Predicated region
        $region37: #{jodie_forward_user_update.1} parent=31 // pred_check
          %p256 = pneg %p66
        $region38: #{jodie_forward_user_update.1} parent=31 // pred_check_branch
          %258 = sbr.rel (%p256) target = $region40
        $region39: #{jodie_forward_user_update.1} parent=31 // pred_region
          %s259 = sand.u32 %s56, 1
          %s260 = scalar_lea.sflag [#allocation3], %s259
          %s261 = sand.u32 %s56, 1
          %s262 = smul.addr %s261, 8
          %s263 = scalar_lea.vmem [#allocation2], %s262
          %s265 = ssub.s32 128, 128
          %266 = vsyncadd %s260, %s265
          %s267 = smul.addr %s20, 128
          %s268 = scalar_lea.hbm %s1, %s267
          %s270 = sshll.u32 %s263, 4
          %s271 = int_to_ptr.vmem [resolvable:$true] %s270
          %273 = dma.hbm_to_vmem [thread:$0]  %s268, 128, %s271, %s260
        $region40: #{jodie_forward_user_update.1} parent=31 // pred_fallthru
          _
        // Predicated region
        $region41: #{jodie_forward_user_update.1} parent=31 // pred_check
          %p274 = pneg %p92
        $region42: #{jodie_forward_user_update.1} parent=31 // pred_check_branch
          %276 = sbr.rel (%p274) target = $region44
        $region43: #{jodie_forward_user_update.1} parent=31 // pred_region
          %p277 = scmp.lt.s32.totalorder %s20, 1
          %s278 = scalar_select %p277, %s20, 1
          %s279 = smul.addr %s278, 8
          %s280 = scalar_lea.vmem %s2, %s279
        $region44: #{jodie_forward_user_update.1} parent=31 // pred_fallthru
          _
      $region32: #{jodie_forward_user_update.1} parent=5 // pred_fallthru
        _
      %p281 = scmp.le.s32.totalorder 1, %s20
      %p282 = scmp.lt.s32.totalorder %s20, 3
      %p283 = pnand %p281, %p282
      %p284 = pneg %p283
      // Predicated region
      $region45: #{jodie_forward_user_update.1} parent=5 // pred_check
        _
      $region46: #{jodie_forward_user_update.1} parent=5 // pred_check_branch
        %286 = sbr.rel (%p283) target = $region48
      $region47: #{jodie_forward_user_update.1} parent=5 // pred_region
        %s287 = ssub.s32 %s20, 1
        %s288 = sand.u32 %s59, 1
        %s289 = scalar_lea.sflag [#allocation3], %s288
        %s290 = sand.u32 %s59, 1
        %s291 = smul.addr %s290, 8
        %s292 = scalar_lea.vmem [#allocation2], %s291
        // Predicated region
        $region49: #{jodie_forward_user_update.1} parent=47 // pred_check
          %p293 = pneg %p72
        $region50: #{jodie_forward_user_update.1} parent=47 // pred_check_branch
          %295 = sbr.rel (%p293) target = $region52
        $region51: #{jodie_forward_user_update.1} parent=47 // pred_region
          %296 = dma.done %s289, 128
        $region52: #{jodie_forward_user_update.1} parent=47 // pred_fallthru
          _
        // Predicated region
        $region53: #{jodie_forward_user_update.1} parent=47 // pred_check
          %p297 = pneg %p119
        $region54: #{jodie_forward_user_update.1} parent=47 // pred_check_branch
          %299 = sbr.rel (%p297) target = $region56
        $region55: #{jodie_forward_user_update.1} parent=47 // pred_region
          %300 = dma.done [#allocation6], 1024
        $region56: #{jodie_forward_user_update.1} parent=47 // pred_fallthru
          _
        %p301 = scmp.lt.s32.totalorder %s25, 1
        %s302 = scalar_select %p301, %s25, 1
        %s303 = smul.addr %s302, 8
        %s304 = scalar_lea.vmem %s0, %s303
        %p305 = pneg %p46
        %p306 = pneg %p43
        %s307 = sand.u32 %s59, 1
        %s308 = scalar_lea.sflag [#allocation3], %s307
        %s309 = sand.u32 %s59, 1
        %s310 = smul.addr %s309, 8
        %s311 = scalar_lea.vmem [#allocation2], %s310
        %p312 = pneg %p72
        %p313 = pneg %p69
        %p314 = scmp.lt.s32.totalorder %s25, 1
        %s315 = scalar_select %p314, %s25, 1
        %s316 = smul.addr %s315, 8
        %s317 = scalar_lea.vmem %s2, %s316
        %p318 = pneg %p98
        %p319 = pneg %p95
        %p320 = pneg %p119
        %p321 = pneg %p116
        %p322 = pneg %p140
        %p323 = pneg %p137
        %p324 = pneg %p161
        %p325 = pneg %p158
        %p326 = pneg %p182
        %p327 = pneg %p179
        %p328 = pneg %p208
        %p329 = pneg %p205
        %s330 = sand.u32 %s195, 1
        %s331 = scalar_lea.sflag [#allocation4], %s330
        %s332 = sand.u32 %s195, 1
        %s333 = smul.addr %s332, 8
        %s334 = scalar_lea.vmem [#allocation7], %s333
        %p335 = scmp.lt.s32.totalorder %s25, 1
        %s336 = scalar_select %p335, %s25, 1
        %s337 = smul.addr %s336, 8
        %s338 = scalar_lea.vmem %s0, %s337
        %p339 = scmp.lt.s32.totalorder %s25, 1
        %s340 = scalar_select %p339, %s25, 1
        %s341 = smul.addr %s340, 8
        %s342 = scalar_lea.vmem %s2, %s341
        %v344 = vld [vmem:[%s338] sm:$0xff]
        %v345 = vpack.c.bf16 %v344, %v344
        %v346 = vld [vmem:[#allocation5] sm:$0xf]
        %v347 = vld [vmem:[#allocation5 + $0x4] sm:$0xf]
        %v348 = vld [vmem:[#allocation5 + $0x8] sm:$0xf]
        %v349 = vld [vmem:[#allocation5 + $0xc] sm:$0xf]
        %v350 = vld [vmem:[#allocation5 + $0x10] sm:$0xf]
        %v351 = vld [vmem:[#allocation5 + $0x14] sm:$0xf]
        %v352 = vld [vmem:[#allocation5 + $0x18] sm:$0xf]
        %v353 = vld [vmem:[#allocation5 + $0x1c] sm:$0xf]
        %v354 = vld [vmem:[#allocation5 + $0x20] sm:$0xf]
        %v355 = vld [vmem:[#allocation5 + $0x24] sm:$0xf]
        %v356 = vld [vmem:[#allocation5 + $0x28] sm:$0xf]
        %v357 = vld [vmem:[#allocation5 + $0x2c] sm:$0xf]
        %v358 = vld [vmem:[#allocation5 + $0x30] sm:$0xf]
        %v359 = vld [vmem:[#allocation5 + $0x34] sm:$0xf]
        %v360 = vld [vmem:[#allocation5 + $0x38] sm:$0xf]
        %v361 = vld [vmem:[#allocation5 + $0x3c] sm:$0xf]
        %v362 = vld [vmem:[%s292] sm:$0xff]
        %v363 = vpack.c.bf16 %v362, %v362
        %v364 = vld [vmem:[%s4] sm:$0xf]
        %v365 = vld [vmem:[%s4 + $0x4] sm:$0xf]
        %v366 = vld [vmem:[%s4 + $0x8] sm:$0xf]
        %v367 = vld [vmem:[%s4 + $0xc] sm:$0xf]
        %v368 = vld [vmem:[%s4 + $0x10] sm:$0xf]
        %v369 = vld [vmem:[%s4 + $0x14] sm:$0xf]
        %v370 = vld [vmem:[%s4 + $0x18] sm:$0xf]
        %v371 = vld [vmem:[%s4 + $0x1c] sm:$0xf]
        %v372 = vld [vmem:[%s4 + $0x20] sm:$0xf]
        %v373 = vld [vmem:[%s4 + $0x24] sm:$0xf]
        %v374 = vld [vmem:[%s4 + $0x28] sm:$0xf]
        %v375 = vld [vmem:[%s4 + $0x2c] sm:$0xf]
        %v376 = vld [vmem:[%s4 + $0x30] sm:$0xf]
        %v377 = vld [vmem:[%s4 + $0x34] sm:$0xf]
        %v378 = vld [vmem:[%s4 + $0x38] sm:$0xf]
        %v379 = vld [vmem:[%s4 + $0x3c] sm:$0xf]
        %v396 = vunpack.c.l.b16 %v364
        %v397 = vunpack.c.l.b16 %v365
        %v398 = vunpack.c.l.b16 %v366
        %v399 = vunpack.c.l.b16 %v367
        %v400 = vunpack.c.l.b16 %v368
        %v401 = vunpack.c.l.b16 %v369
        %v402 = vunpack.c.l.b16 %v370
        %v403 = vunpack.c.l.b16 %v371
        %v404 = vunpack.c.l.b16 %v372
        %v405 = vunpack.c.l.b16 %v373
        %v406 = vunpack.c.l.b16 %v374
        %v407 = vunpack.c.l.b16 %v375
        %v408 = vunpack.c.l.b16 %v376
        %v409 = vunpack.c.l.b16 %v377
        %v410 = vunpack.c.l.b16 %v378
        %v411 = vunpack.c.l.b16 %v379
        %v412 = vpack.c.b16 %v397, %v396
        %v413 = vpack.c.b16 %v399, %v398
        %v414 = vpack.c.b16 %v401, %v400
        %v415 = vpack.c.b16 %v403, %v402
        %v416 = vpack.c.b16 %v405, %v404
        %v417 = vpack.c.b16 %v407, %v406
        %v418 = vpack.c.b16 %v409, %v408
        %v419 = vpack.c.b16 %v411, %v410
        %428 = vmatprep.subr.bf16.mxu0 0
        %429 = vmatpush1.bf16.msra.mxu0 %v419
        %430 = vmatprep.subr.bf16.mxu0 0
        %431 = vmatpush1.bf16.msra.mxu0 %v418
        %432 = vmatprep.subr.bf16.mxu0 0
        %433 = vmatpush1.bf16.msra.mxu0 %v417
        %434 = vmatprep.subr.bf16.mxu0 0
        %435 = vmatpush1.bf16.msra.mxu0 %v416
        %436 = vmatprep.subr.bf16.mxu0 0
        %437 = vmatpush1.bf16.msra.mxu0 %v415
        %438 = vmatprep.subr.bf16.mxu0 0
        %439 = vmatpush1.bf16.msra.mxu0 %v414
        %440 = vmatprep.subr.bf16.mxu0 0
        %441 = vmatpush1.bf16.msra.mxu0 %v413
        %442 = vmatprep.subr.bf16.mxu0 0
        %443 = vmatpush1.bf16.msra.mxu0 %v412
        %444 = vmatprep.subr.bf16.mxu0 0
        %445 = vmatpush2.bf16.msra.mxu0 0
        %446 = vmatprep.subr.bf16.mxu0 0
        %447 = vmatpush2.bf16.msra.mxu0 0
        %448 = vmatprep.subr.bf16.mxu0 0
        %449 = vmatpush2.bf16.msra.mxu0 0
        %450 = vmatprep.subr.bf16.mxu0 0
        %451 = vmatpush2.bf16.msra.mxu0 0
        %452 = vmatprep.subr.bf16.mxu0 0
        %453 = vmatpush2.bf16.msra.mxu0 0
        %454 = vmatprep.subr.bf16.mxu0 0
        %455 = vmatpush2.bf16.msra.mxu0 0
        %456 = vmatprep.subr.bf16.mxu0 0
        %457 = vmatpush2.bf16.msra.mxu0 0
        %458 = vmatprep.subr.bf16.mxu0 0
        %459 = vmatpush2.bf16.msra.mxu0 0
        %460 = vmatprep.mubr.bf16.mxu0 0
        %461 = vmatmul.mubr.bf16.gmra.mxu0 %v363
        %v462 = vpop.f32.mrf.mxu0
        %v463 = vadd.f32 0.0, %v462
        %v464 = vpop.f32.mrf.mxu0
        %v465 = vpop.f32.mrf.mxu0
        %v466 = vpop.f32.mrf.mxu0
        %467 = vdwg.mxu0
        %v484 = vunpack.c.l.b16 %v346
        %v485 = vunpack.c.l.b16 %v347
        %v486 = vunpack.c.l.b16 %v348
        %v487 = vunpack.c.l.b16 %v349
        %v488 = vunpack.c.l.b16 %v350
        %v489 = vunpack.c.l.b16 %v351
        %v490 = vunpack.c.l.b16 %v352
        %v491 = vunpack.c.l.b16 %v353
        %v492 = vunpack.c.l.b16 %v354
        %v493 = vunpack.c.l.b16 %v355
        %v494 = vunpack.c.l.b16 %v356
        %v495 = vunpack.c.l.b16 %v357
        %v496 = vunpack.c.l.b16 %v358
        %v497 = vunpack.c.l.b16 %v359
        %v498 = vunpack.c.l.b16 %v360
        %v499 = vunpack.c.l.b16 %v361
        %v500 = vpack.c.b16 %v485, %v484
        %v501 = vpack.c.b16 %v487, %v486
        %v502 = vpack.c.b16 %v489, %v488
        %v503 = vpack.c.b16 %v491, %v490
        %v504 = vpack.c.b16 %v493, %v492
        %v505 = vpack.c.b16 %v495, %v494
        %v506 = vpack.c.b16 %v497, %v496
        %v507 = vpack.c.b16 %v499, %v498
        %516 = vmatprep.subr.bf16.mxu0 0
        %517 = vmatpush1.bf16.msra.mxu0 %v507
        %518 = vmatprep.subr.bf16.mxu0 0
        %519 = vmatpush1.bf16.msra.mxu0 %v506
        %520 = vmatprep.subr.bf16.mxu0 0
        %521 = vmatpush1.bf16.msra.mxu0 %v505
        %522 = vmatprep.subr.bf16.mxu0 0
        %523 = vmatpush1.bf16.msra.mxu0 %v504
        %524 = vmatprep.subr.bf16.mxu0 0
        %525 = vmatpush1.bf16.msra.mxu0 %v503
        %526 = vmatprep.subr.bf16.mxu0 0
        %527 = vmatpush1.bf16.msra.mxu0 %v502
        %528 = vmatprep.subr.bf16.mxu0 0
        %529 = vmatpush1.bf16.msra.mxu0 %v501
        %530 = vmatprep.subr.bf16.mxu0 0
        %531 = vmatpush1.bf16.msra.mxu0 %v500
        %532 = vmatprep.subr.bf16.mxu0 0
        %533 = vmatpush2.bf16.msra.mxu0 0
        %534 = vmatprep.subr.bf16.mxu0 0
        %535 = vmatpush2.bf16.msra.mxu0 0
        %536 = vmatprep.subr.bf16.mxu0 0
        %537 = vmatpush2.bf16.msra.mxu0 0
        %538 = vmatprep.subr.bf16.mxu0 0
        %539 = vmatpush2.bf16.msra.mxu0 0
        %540 = vmatprep.subr.bf16.mxu0 0
        %541 = vmatpush2.bf16.msra.mxu0 0
        %542 = vmatprep.subr.bf16.mxu0 0
        %543 = vmatpush2.bf16.msra.mxu0 0
        %544 = vmatprep.subr.bf16.mxu0 0
        %545 = vmatpush2.bf16.msra.mxu0 0
        %546 = vmatprep.subr.bf16.mxu0 0
        %547 = vmatpush2.bf16.msra.mxu0 0
        %548 = vmatprep.mubr.bf16.mxu0 0
        %549 = vmatmul.mubr.bf16.gmra.mxu0 %v345
        %v550 = vpop.f32.mrf.mxu0
        %v551 = vadd.f32 %v463, %v550
        %v552 = vpop.f32.mrf.mxu0
        %v553 = vpop.f32.mrf.mxu0
        %v554 = vpop.f32.mrf.mxu0
        %555 = vdwg.mxu0
        %v556 = vld [vmem:[%s342] sm:$0xff]
        %v557 = vpack.c.bf16 %v556, %v556
        %v558 = vld [vmem:[%s5] sm:$0x7]
        %vm559 = vcmask 39936
        %v561 = vsel %vm559, %v557, 0
        %vm563 = vcmask 1041408
        %vm564 = vcmask 1042432
        %v565 = vsel %vm563, 4294967295, 65535
        %v566 = vsel %vm564, %v565, 0
        %v568 = vand.u32 %v558, %v566
        %570 = vmatprep.subr.bf16.mxu0 0
        %571 = vmatpush1.bf16.msra.mxu0 0
        %572 = vmatprep.subr.bf16.mxu0 0
        %573 = vmatpush1.bf16.msra.mxu0 0
        %574 = vmatprep.subr.bf16.mxu0 0
        %575 = vmatpush1.bf16.msra.mxu0 0
        %576 = vmatprep.subr.bf16.mxu0 0
        %577 = vmatpush1.bf16.msra.mxu0 0
        %578 = vmatprep.subr.bf16.mxu0 0
        %579 = vmatpush1.bf16.msra.mxu0 0
        %580 = vmatprep.subr.bf16.mxu0 0
        %581 = vmatpush1.bf16.msra.mxu0 0
        %582 = vmatprep.subr.bf16.mxu0 0
        %583 = vmatpush1.bf16.msra.mxu0 0
        %584 = vmatprep.subr.bf16.mxu0 0
        %585 = vmatpush1.bf16.msra.mxu0 %v568
        %586 = vmatprep.subr.bf16.mxu0 0
        %587 = vmatpush2.bf16.msra.mxu0 0
        %588 = vmatprep.subr.bf16.mxu0 0
        %589 = vmatpush2.bf16.msra.mxu0 0
        %590 = vmatprep.subr.bf16.mxu0 0
        %591 = vmatpush2.bf16.msra.mxu0 0
        %592 = vmatprep.subr.bf16.mxu0 0
        %593 = vmatpush2.bf16.msra.mxu0 0
        %594 = vmatprep.subr.bf16.mxu0 0
        %595 = vmatpush2.bf16.msra.mxu0 0
        %596 = vmatprep.subr.bf16.mxu0 0
        %597 = vmatpush2.bf16.msra.mxu0 0
        %598 = vmatprep.subr.bf16.mxu0 0
        %599 = vmatpush2.bf16.msra.mxu0 0
        %600 = vmatprep.subr.bf16.mxu0 0
        %601 = vmatpush2.bf16.msra.mxu0 0
        %602 = vmatprep.mubr.bf16.mxu0 0
        %603 = vmatmul.mubr.bf16.gmra.mxu0 %v561
        %v604 = vpop.f32.mrf.mxu0
        %v605 = vadd.f32 0.0, %v604
        %v606 = vpop.f32.mrf.mxu0
        %v607 = vpop.f32.mrf.mxu0
        %v608 = vpop.f32.mrf.mxu0
        %609 = vdwg.mxu0
        %v610 = vadd.f32 %v551, %v605
        %v611 = vld [vmem:[%s6] sm:$0x1]
        %v613 = vlaneseq
        %v614 = vshrl.u32 %v613, 7
        %v615 = vsub.s32 0, %v614
        %v616 = vrot.slane %v611, %v615
        %v618 = vadd.f32 %v610, %v616
        %v619 = vtanh.pop %v618
        %v620 = vmul.f32 %v619, %v619
        %621 = vadd.xlane.f32.xlu0 %v620
        %v622 = vpop.xlane.xlu0 %621
        %v623 = vmax.f32 %v622, 1e-24
        %v624 = vrsqrt.pop %v623
        %v625 = vmul.f32 %v619, %v624
        %626 = vst [vmem:[%s334] sm:$0xff] %v625
        %s627 = sand.u32 %s195, 1
        %s628 = scalar_lea.sflag [#allocation4], %s627
        %s629 = sand.u32 %s195, 1
        %s630 = smul.addr %s629, 8
        %s631 = scalar_lea.vmem [#allocation7], %s630
        // Predicated region
        $region57: #{jodie_forward_user_update.1} parent=47 // pred_check
          %p632 = pneg %p205
        $region58: #{jodie_forward_user_update.1} parent=47 // pred_check_branch
          %634 = sbr.rel (%p632) target = $region60
        $region59: #{jodie_forward_user_update.1} parent=47 // pred_region
          %s636 = ssub.s32 128, 128
          %637 = vsyncadd %s628, %s636
          %s638 = smul.addr %s25, 128
          %s639 = scalar_lea.hbm %s7, %s638
          %s641 = sshll.u32 %s631, 4
          %s642 = int_to_ptr.vmem [resolvable:$true] %s641
          %644 = dma.vmem_to_hbm [thread:$0]  %s642, 128, %s639, %s628
        $region60: #{jodie_forward_user_update.1} parent=47 // pred_fallthru
          _
      $region48: #{jodie_forward_user_update.1} parent=5 // pred_fallthru
        _
      %p645 = scmp.le.s32.totalorder 2, %s20
      // Predicated region
      $region61: #{jodie_forward_user_update.1} parent=5 // pred_check
        %p646 = pneg %p645
      $region62: #{jodie_forward_user_update.1} parent=5 // pred_check_branch
        %648 = sbr.rel (%p646) target = $region64
      $region63: #{jodie_forward_user_update.1} parent=5 // pred_region
        %s649 = ssub.s32 %s20, 2
        // Predicated region
        $region65: #{jodie_forward_user_update.1} parent=63 // pred_check
          %p650 = pneg %p211
        $region66: #{jodie_forward_user_update.1} parent=63 // pred_check_branch
          %652 = sbr.rel (%p650) target = $region68
        $region67: #{jodie_forward_user_update.1} parent=63 // pred_region
          %s653 = sand.u32 %s196, 1
          %s654 = scalar_lea.sflag [#allocation4], %s653
          %s655 = sand.u32 %s196, 1
          %s656 = smul.addr %s655, 8
          %s657 = scalar_lea.vmem [#allocation7], %s656
          %658 = dma.done %s654, 128
        $region68: #{jodie_forward_user_update.1} parent=63 // pred_fallthru
          _
      $region64: #{jodie_forward_user_update.1} parent=5 // pred_fallthru
        _
    $region6: #{jodie_forward_user_update.1} parent=1 // loop_footer
      %s24 = sadd.s32 1, %s20
    $region7: #{jodie_forward_user_update.1} parent=1 // loop_footer_branch
      %19 = sbr.rel target = $region3
    $region8: #{jodie_forward_user_update.1} parent=1 // loop_exit
      _
    %659 = vsyncpa [#allocation3], 1
    %s660 = scalar_lea.sflag [#allocation3], 1
    %661 = vsyncpa %s660, 1
    %662 = vsyncpa [#allocation6], 1
    %663 = vsyncpa [#allocation4], 1
    %s664 = scalar_lea.sflag [#allocation4], 1
    %665 = vsyncpa %s664, 1

</llo_original>
